<compile_context>
chip_gen: v7x
topology: tpu7x:2x2x1
jax: 0.10.0
libtpu: 0.0.40
codegen_flags: <defaults>
</compile_context>

<pallas_src>
import jax
import jax.numpy as jnp
from jax.experimental import pallas as pl
from jax.experimental.pallas import tpu as pltpu


def _identity_dma_kernel(x_hbm, o_hbm, sem):
    # Direct HBM -> HBM copy on the DMA engines; no VMEM staging, no grid.
    cp = pltpu.make_async_copy(x_hbm, o_hbm, sem)
    cp.start()
    cp.wait()


def identity_extractor(x: jnp.ndarray, *, materialize_copy: bool = True) -> jnp.ndarray:
    """Identity forward pass.

    materialize_copy=False returns `x` untouched (the truly free path).
    materialize_copy=True routes through a Pallas kernel that performs one
    whole-array HBM->HBM DMA (no VMEM round trip, no tiling).
    """
    if not materialize_copy:
        return x

    return pl.pallas_call(
        _identity_dma_kernel,
        out_shape=jax.ShapeDtypeStruct(x.shape, x.dtype),
        in_specs=[pl.BlockSpec(memory_space=pl.ANY)],
        out_specs=pl.BlockSpec(memory_space=pl.ANY),
        scratch_shapes=[pltpu.SemaphoreType.DMA(())],
    )(x)


class IdentityExtractor:
    """JAX mirror of the PyTorch IdentityExtractor module."""

    def __init__(self, n_latents: int, embed_dim: int, n_heads: int) -> None:
        # Module has no parameters; it just records these attributes.
        self.n_latents = n_latents
        self.embed_dim = embed_dim
        self.n_heads = 2 * n_heads

    def __call__(self, x: jnp.ndarray, *, materialize_copy: bool = True) -> jnp.ndarray:
        return identity_extractor(x, materialize_copy=materialize_copy)


if __name__ == "__main__":
    # Small shapes consistent with the module: batch=2, n_latents=8, embed_dim=128.
    key = jax.random.PRNGKey(0)
    B, T, D = 2, 8, 128
    x = jax.random.normal(key, (B, T, D), dtype=jnp.float32)

    extractor = IdentityExtractor(n_latents=T, embed_dim=D, n_heads=4)

    # Kernel path (HBM->HBM DMA copy).
    y = extractor(x)
    y = jax.block_until_ready(y)
    assert y.shape == x.shape and y.dtype == x.dtype
    assert bool(jnp.array_equal(y, x))

    # Zero-cost path (returns the input unchanged).
    z = extractor(x, materialize_copy=False)
    assert z is x

    print("KERNEL_OK")
</pallas_src>

<mosaic_0001>
module attributes {stable_mosaic.version = 11 : i64} {
  func.func @_identity_dma_kernel(%arg0: memref<2x8x128xf32, #tpu.memory_space<any>>, %arg1: memref<2x8x128xf32, #tpu.memory_space<any>>, %arg2: memref<!tpu.dma_semaphore, #tpu.memory_space<semaphore_mem>>) attributes {dimension_semantics = [], scalar_prefetch = 0 : i64, scratch_operands = 1 : i64, tpu.core_type = #tpu.core_type<tc>} {
    tpu.enqueue_dma source(%arg0 : memref<2x8x128xf32, #tpu.memory_space<any>>) target(%arg1 : memref<2x8x128xf32, #tpu.memory_space<any>>) target_semaphore(%arg2 : memref<!tpu.dma_semaphore, #tpu.memory_space<semaphore_mem>>)
    tpu.wait_dma2 semaphore(%arg2 : memref<!tpu.dma_semaphore, #tpu.memory_space<semaphore_mem>>) src(%arg0 : memref<2x8x128xf32, #tpu.memory_space<any>>) dst(%arg1 : memref<2x8x128xf32, #tpu.memory_space<any>>)
    return
  }
}

</mosaic_0001>

<llo_original>
// kernel: tpu_custom_call.1
$region0: #{tpu_custom_call.1}
  #allocation0 [shape = 'u32[]', space=smem, size = 0x4, offset = 0x4, fixed_abs, tag = 'smem constant byte address 0x4 - core index']
  #allocation1 [shape = 'u32[144,128]{1,0:T(1,128)}', space=vmem, size = 0x12000, scoped, tag = 'internal scratch']
  #allocation2 [shape = 's32[1]{0}', space=sflag, size = 0x4, scoped, tag = 'scratch operand']
  #allocation3 [shape = 's32[]', space=sflag, size = 0x4, offset = 0, fixed_abs, tag = 'sflag constant byte address 0x0 - dummy sync flag']
  #allocation4 [shape = 'u32[0]{0}', space=smem, size = 0, offset = 0, fixed_abs, tag = 'smem constant byte address 0x0 - null']
  %s0 = inlined_call_operand.hbm [shape: f32[2,8,128], index: 0, kind: input, shape index: {}]
  %s1 = inlined_call_operand.hbm [shape: f32[2,8,128], index: 1, kind: output, shape index: {}]
  %s2 = sld [smem:[#allocation0]]
  $region2: #{tpu_custom_call.1} parent=0
    _
  %s4 = ssub.s32 1, %s2
  %s5 = scalar_select 0, %s4, %s2
  %s7 = sshll.u32 1, 14
  %s8 = sxor.u32 4294967295, %s7
  %s11 = sshll.u32 3, 24
  %s12 = sxor.u32 4294967295, %s11
  %s13 = sand.u32 0, %s12
  %s15 = sor.u32 %s13, 0
  %18 = dma.general %s0, 256, %s1, [#allocation2], [#allocation3], [#allocation4], %s15, 0
  %s19 = smul.u32 2, 8
  %s20 = smul.u32 %s19, 1
  %s21 = sshll.u32 %s20, 4
  %22 = dma.done [#allocation2], %s21
  %23 = vsyncmov [#allocation2]
  %s24 = vpop.sfrf %23
  %p25 = scmp.eq.s32.totalorder %s24, 0
  %p26 = pneg %p25
  %28 = shalt.err (%p26)

</llo_original>
